<compile_context>
chip_gen: v6e
topology: v6e:2x2x1
jax: 0.10.0
libtpu: 0.0.40
codegen_flags: <defaults>
</compile_context>

<pallas_src>
import functools

import jax
import jax.numpy as jnp
from jax.experimental import pallas as pl
from jax.experimental.pallas import tpu as pltpu

_EPS = 1e-5
_K = 3  # conv kernel size


def _conv_layer_kernel(x_ref, w_ref, gamma_ref, beta_ref, o_ref, *, true_count):
    # x_ref:     (L, Np, C_in)    full input, batch zero-padded to Np % 8 == 0
    # w_ref:     (3*C_in, Ct)     conv taps packed along K (row = k*C_in + ci)
    # gamma_ref: (1, Ct)          BN gamma
    # beta_ref:  (1, Ct)          BN beta
    # o_ref:     (Lp, Np, Ct)     pooled output tile
    L, Np, Cin = x_ref.shape
    Lp, _, Ct = o_ref.shape
    Lc = L + 2                                  # conv output length (circular pad=2, k=3, s=1)

    x = x_ref[...]

    # --- circular padding (2 each side) along the leading length axis (untiled -> cheap) ---
    xpad = jnp.concatenate([x[L - 2:], x, x[:2]], axis=0)             # (L+4, Np, Cin)

    # --- Conv1d: pack the 3 shifted tap views along lanes -> ONE matmul with K = 3*C_in ---
    lhs = jnp.concatenate(
        [xpad[0:Lc], xpad[1:Lc + 1], xpad[2:Lc + 2]], axis=-1)        # (Lc, Np, 3*Cin)
    lhs2 = lhs.reshape(Lc * Np, _K * Cin)       # Np % 8 == 0 -> sublane-aligned, layout no-op
    acc = jnp.dot(lhs2, w_ref[...], preferred_element_type=jnp.float32)  # (Lc*Np, Ct)
    # conv bias omitted: exactly cancelled by the training-mode BN mean subtraction.

    # --- BatchNorm1d, single-pass batch stats (biased variance), folded into one FMA ---
    # Padded batch rows are exactly zero after the conv (no bias), so they contribute
    # nothing to the sums; divide by the TRUE count N*Lc.
    inv_cnt = jnp.float32(1.0 / true_count)
    s1 = jnp.sum(acc, axis=0, keepdims=True)                          # (1, Ct)
    s2 = jnp.sum(acc * acc, axis=0, keepdims=True)                    # (1, Ct)
    mean = s1 * inv_cnt
    var = s2 * inv_cnt - mean * mean
    scale = gamma_ref[...] * jax.lax.rsqrt(var + _EPS)                # (1, Ct)
    shift = beta_ref[...] - mean * scale
    y = acc * scale + shift

    # --- ELU (alpha = 1) ---
    y = jnp.where(y > 0.0, y, jnp.exp(jnp.minimum(y, 0.0)) - 1.0)
    y = y.reshape(Lc, Np, Ct)

    # --- MaxPool1d(kernel=3, stride=2, padding=1), pad value -inf ---
    #     out[t] = max(z[2t], z[2t+1], z[2t+2]) with z = [-inf, y, -inf, ...]
    #     Single padded copy; even/odd split is a leading-dim reshape (layout no-op).
    neg = jnp.full((1, Np, Ct), -jnp.inf, jnp.float32)
    tail = 2 * Lp - Lc                          # 0 (Lc even) or 1 (Lc odd); static
    z = jnp.concatenate([neg, y] + [neg] * (1 + tail), axis=0)        # (2*Lp+2, Np, Ct)
    ze = z.reshape(Lp + 1, 2, Np, Ct)
    a = jnp.maximum(ze[:, 0], ze[:, 1])         # max(z[2t], z[2t+1]), t = 0..Lp
    o_ref[...] = jnp.maximum(a[:Lp], ze[1:Lp + 1, 0]).astype(o_ref.dtype)  # + z[2t+2]


def conv_layer_forward(x, conv_w, conv_b, bn_gamma, bn_beta):
    """x: (c_in, batch, length) -- same layout the PyTorch module receives.
    conv_w: (c_out=c_in, c_in, 3) PyTorch Conv1d weight layout.
    conv_b is accepted for API parity but unused: training-mode BatchNorm's mean
    subtraction cancels it exactly.  (If BN were run in eval mode with running
    stats, the bias would have to be re-added.)
    Returns (c_in, batch, L_pooled), matching ConvLayer.forward."""
    del conv_b
    C, N, L = x.shape
    Lc = L + 2                            # conv output length
    Lp = (Lc - 1) // 2 + 1                # maxpool k=3, s=2, p=1
    Np = ((N + 7) // 8) * 8               # sublane-pad batch -> full vregs, aligned reshapes

    x_lnc = jnp.transpose(x, (2, 1, 0)).astype(jnp.float32)           # (L, N, C)
    if Np != N:
        # zero padding: padded rows give conv output exactly 0 (bias dropped),
        # BN sums divide by the true N*Lc, so statistics stay exact.
        x_lnc = jnp.pad(x_lnc, ((0, 0), (0, Np - N), (0, 0)))
    # taps packed host-side to (3*C_in, C_out): row index k*C_in + ci
    w_pack = jnp.transpose(conv_w, (2, 1, 0)).reshape(_K * C, C).astype(jnp.float32)
    g_r = bn_gamma.reshape(1, C).astype(jnp.float32)
    bt_r = bn_beta.reshape(1, C).astype(jnp.float32)

    # lane-aligned output-channel tile (BN stats are per-channel -> C_out tiling is safe)
    if C <= 128:
        ct = C
    elif C % 256 == 0:
        ct = 256                          # fills the 256-wide MXU N dim on v6e/v7x
    else:
        ct = 128
    grid = (pl.cdiv(C, ct),)

    kernel = functools.partial(_conv_layer_kernel, true_count=float(N * Lc))

    out_lnc = pl.pallas_call(
        kernel,
        out_shape=jax.ShapeDtypeStruct((Lp, Np, C), jnp.float32),
        grid=grid,
        in_specs=[
            pl.BlockSpec((L, Np, C), lambda j: (0, 0, 0)),      # all C_in, resident block
            pl.BlockSpec((_K * C, ct), lambda j: (0, j)),       # packed-weight C_out tile
            pl.BlockSpec((1, ct), lambda j: (0, j)),            # gamma tile
            pl.BlockSpec((1, ct), lambda j: (0, j)),            # beta tile
        ],
        out_specs=pl.BlockSpec((Lp, Np, ct), lambda j: (0, 0, j)),
        compiler_params=pltpu.CompilerParams(
            dimension_semantics=("parallel",),                  # C_out tiles are independent
            vmem_limit_bytes=48 * 1024 * 1024),                 # headroom under v7x's 64 MiB
    )(x_lnc, w_pack, g_r, bt_r)

    out_lnc = out_lnc[:, :N, :]                                 # drop padded batch rows
    return jnp.transpose(out_lnc, (2, 1, 0))                    # back to (c_in, batch, Lp)


def ref_forward(x, conv_w, conv_b, bn_gamma, bn_beta):
    """Pure-JAX reference mirroring the PyTorch module (NCL layout)."""
    xt = jnp.transpose(x, (1, 0, 2))                                  # (N, C, L)
    xpad = jnp.concatenate([xt[..., -2:], xt, xt[..., :2]], axis=-1)
    conv = jax.lax.conv_general_dilated(
        xpad, conv_w, window_strides=(1,), padding="VALID",
        dimension_numbers=("NCH", "OIH", "NCH"))
    conv = conv + conv_b[None, :, None]
    mean = jnp.mean(conv, axis=(0, 2), keepdims=True)
    var = jnp.mean(jnp.square(conv - mean), axis=(0, 2), keepdims=True)
    y = (conv - mean) * jax.lax.rsqrt(var + _EPS)
    y = y * bn_gamma[None, :, None] + bn_beta[None, :, None]
    y = jnp.where(y > 0, y, jnp.exp(jnp.minimum(y, 0.0)) - 1.0)
    Lc = y.shape[-1]
    Lp = (Lc - 1) // 2 + 1
    neg = jnp.full(y.shape[:-1] + (1,), -jnp.inf, y.dtype)
    yp = jnp.concatenate([neg, y, neg], axis=-1)
    pooled = jnp.stack(
        [jnp.max(yp[..., 2 * t:2 * t + 3], axis=-1) for t in range(Lp)], axis=-1)
    return jnp.transpose(pooled, (1, 0, 2))


if __name__ == "__main__":
    key = jax.random.PRNGKey(0)
    k0, k1, k2, k3, k4 = jax.random.split(key, 5)

    C_IN, BATCH, L = 4, 2, 16
    # module input: (c_in, batch, length) -- forward permutes to (batch, c_in, length)
    x = jax.random.normal(k0, (C_IN, BATCH, L), jnp.float32)

    # deterministic synthetic parameters (shapes per ConvLayer.__init__)
    conv_w = 0.3 * jax.random.normal(k1, (C_IN, C_IN, _K), jnp.float32)   # Conv1d.weight (out, in, k)
    conv_b = 0.1 * jax.random.normal(k2, (C_IN,), jnp.float32)            # Conv1d.bias
    bn_gamma = 1.0 + 0.1 * jax.random.normal(k3, (C_IN,), jnp.float32)    # BatchNorm1d.weight
    bn_beta = 0.05 * jax.random.normal(k4, (C_IN,), jnp.float32)          # BatchNorm1d.bias

    out = conv_layer_forward(x, conv_w, conv_b, bn_gamma, bn_beta)
    out = jax.block_until_ready(out)

    ref = ref_forward(x, conv_w, conv_b, bn_gamma, bn_beta)
    assert out.shape == ref.shape == (C_IN, BATCH, 9), out.shape
    assert bool(jnp.allclose(out, ref, atol=2e-4, rtol=2e-4)), float(jnp.max(jnp.abs(out - ref)))

    print("KERNEL_OK")
</pallas_src>

<mosaic_0001>
module attributes {stable_mosaic.version = 11 : i64} {
  func.func @_conv_layer_kernel(%arg0: i32, %arg1: memref<16x8x4xf32, #tpu.memory_space<vmem>>, %arg2: memref<12x4xf32, #tpu.memory_space<vmem>>, %arg3: memref<1x4xf32, #tpu.memory_space<vmem>>, %arg4: memref<1x4xf32, #tpu.memory_space<vmem>>, %arg5: memref<9x8x4xf32, #tpu.memory_space<vmem>>) attributes {dimension_semantics = [#tpu.dimension_semantics<parallel>], iteration_bounds = array<i64: 1>, scalar_prefetch = 0 : i64, scratch_operands = 0 : i64, tpu.core_type = #tpu.core_type<tc>, window_params = [{pipeline_mode = #tpu.pipeline_mode<synchronous>, transform_indices = @transform_0, window_bounds = array<i64: 16, 8, 4>}, {transform_indices = @transform_1, window_bounds = array<i64: 12, 4>}, {transform_indices = @transform_2, window_bounds = array<i64: 1, 4>}, {transform_indices = @transform_3, window_bounds = array<i64: 1, 4>}, {transform_indices = @transform_4, window_bounds = array<i64: 9, 8, 4>}]} {
    %c0 = arith.constant 0 : index
    %c0_0 = arith.constant 0 : index
    %c0_1 = arith.constant 0 : index
    %0 = vector.load %arg1[%c0, %c0_0, %c0_1] : memref<16x8x4xf32, #tpu.memory_space<vmem>>, vector<16x8x4xf32>
    %1 = vector.extract_strided_slice %0 {offsets = [14, 0, 0], sizes = [2, 8, 4], strides = [1, 1, 1]} : vector<16x8x4xf32> to vector<2x8x4xf32>
    %2 = vector.extract_strided_slice %0 {offsets = [0, 0, 0], sizes = [2, 8, 4], strides = [1, 1, 1]} : vector<16x8x4xf32> to vector<2x8x4xf32>
    %3 = tpu.concatenate %1, %0, %2 in 0 : vector<2x8x4xf32>, vector<16x8x4xf32>, vector<2x8x4xf32> -> vector<20x8x4xf32>
    %4 = vector.extract_strided_slice %3 {offsets = [0, 0, 0], sizes = [18, 8, 4], strides = [1, 1, 1]} : vector<20x8x4xf32> to vector<18x8x4xf32>
    %5 = vector.extract_strided_slice %3 {offsets = [1, 0, 0], sizes = [18, 8, 4], strides = [1, 1, 1]} : vector<20x8x4xf32> to vector<18x8x4xf32>
    %6 = vector.extract_strided_slice %3 {offsets = [2, 0, 0], sizes = [18, 8, 4], strides = [1, 1, 1]} : vector<20x8x4xf32> to vector<18x8x4xf32>
    %7 = tpu.concatenate %4, %5, %6 in 2 : vector<18x8x4xf32>, vector<18x8x4xf32>, vector<18x8x4xf32> -> vector<18x8x12xf32>
    %8 = vector.shape_cast %7 : vector<18x8x12xf32> to vector<144x12xf32>
    %c0_2 = arith.constant 0 : index
    %c0_3 = arith.constant 0 : index
    %9 = vector.load %arg2[%c0_2, %c0_3] : memref<12x4xf32, #tpu.memory_space<vmem>>, vector<12x4xf32>
    %cst = arith.constant dense<0.000000e+00> : vector<144x4xf32>
    %10 = tpu.matmul %8, %9, %cst {dimension_numbers = #tpu.dot_dimension_numbers<[1], [0], [0], [1], [0, 0, 1, 1], [], []>} : vector<144x12xf32>, vector<12x4xf32>, vector<144x4xf32> -> vector<144x4xf32>
    %cst_4 = arith.constant dense<0.000000e+00> : vector<4xf32>
    %11 = vector.multi_reduction <add>, %10, %cst_4 [0] : vector<144x4xf32> to vector<4xf32>
    %12 = vector.shape_cast %11 : vector<4xf32> to vector<1x4xf32>
    %13 = arith.mulf %10, %10 : vector<144x4xf32>
    %cst_5 = arith.constant dense<0.000000e+00> : vector<4xf32>
    %14 = vector.multi_reduction <add>, %13, %cst_5 [0] : vector<144x4xf32> to vector<4xf32>
    %15 = vector.shape_cast %14 : vector<4xf32> to vector<1x4xf32>
    %cst_6 = arith.constant 0.027777778 : f32
    %16 = vector.broadcast %cst_6 : f32 to vector<1x4xf32>
    %17 = arith.mulf %12, %16 : vector<1x4xf32>
    %cst_7 = arith.constant 0.027777778 : f32
    %18 = vector.broadcast %cst_7 : f32 to vector<1x4xf32>
    %19 = arith.mulf %15, %18 : vector<1x4xf32>
    %20 = arith.mulf %17, %17 : vector<1x4xf32>
    %21 = arith.subf %19, %20 : vector<1x4xf32>
    %c0_8 = arith.constant 0 : index
    %c0_9 = arith.constant 0 : index
    %22 = vector.load %arg3[%c0_8, %c0_9] : memref<1x4xf32, #tpu.memory_space<vmem>>, vector<1x4xf32>
    %cst_10 = arith.constant 9.99999974E-6 : f32
    %23 = vector.broadcast %cst_10 : f32 to vector<1x4xf32>
    %24 = arith.addf %21, %23 : vector<1x4xf32>
    %25 = math.rsqrt %24 : vector<1x4xf32>
    %26 = arith.mulf %22, %25 : vector<1x4xf32>
    %c0_11 = arith.constant 0 : index
    %c0_12 = arith.constant 0 : index
    %27 = vector.load %arg4[%c0_11, %c0_12] : memref<1x4xf32, #tpu.memory_space<vmem>>, vector<1x4xf32>
    %28 = arith.mulf %17, %26 : vector<1x4xf32>
    %29 = arith.subf %27, %28 : vector<1x4xf32>
    %30 = vector.broadcast %26 : vector<1x4xf32> to vector<144x4xf32>
    %31 = arith.mulf %10, %30 : vector<144x4xf32>
    %32 = vector.broadcast %29 : vector<1x4xf32> to vector<144x4xf32>
    %33 = arith.addf %31, %32 : vector<144x4xf32>
    %cst_13 = arith.constant 0.000000e+00 : f32
    %34 = vector.broadcast %cst_13 : f32 to vector<144x4xf32>
    %35 = arith.cmpf ogt, %33, %34 : vector<144x4xf32>
    %cst_14 = arith.constant 0.000000e+00 : f32
    %36 = vector.broadcast %cst_14 : f32 to vector<144x4xf32>
    %37 = arith.minimumf %33, %36 : vector<144x4xf32>
    %38 = math.exp %37 : vector<144x4xf32>
    %cst_15 = arith.constant 1.000000e+00 : f32
    %39 = vector.broadcast %cst_15 : f32 to vector<144x4xf32>
    %40 = arith.subf %38, %39 : vector<144x4xf32>
    %41 = arith.select %35, %33, %40 : vector<144x4xi1>, vector<144x4xf32>
    %42 = vector.shape_cast %41 : vector<144x4xf32> to vector<18x8x4xf32>
    %cst_16 = arith.constant 0xFF800000 : f32
    %43 = vector.broadcast %cst_16 : f32 to vector<1x8x4xf32>
    %44 = tpu.concatenate %43, %42, %43 in 0 : vector<1x8x4xf32>, vector<18x8x4xf32>, vector<1x8x4xf32> -> vector<20x8x4xf32>
    %45 = vector.shape_cast %44 : vector<20x8x4xf32> to vector<10x2x8x4xf32>
    %46 = vector.extract_strided_slice %45 {offsets = [0, 0, 0, 0], sizes = [10, 1, 8, 4], strides = [1, 1, 1, 1]} : vector<10x2x8x4xf32> to vector<10x1x8x4xf32>
    %47 = vector.shape_cast %46 : vector<10x1x8x4xf32> to vector<10x8x4xf32>
    %48 = vector.extract_strided_slice %45 {offsets = [0, 1, 0, 0], sizes = [10, 1, 8, 4], strides = [1, 1, 1, 1]} : vector<10x2x8x4xf32> to vector<10x1x8x4xf32>
    %49 = vector.shape_cast %48 : vector<10x1x8x4xf32> to vector<10x8x4xf32>
    %50 = arith.maximumf %47, %49 : vector<10x8x4xf32>
    %51 = vector.extract_strided_slice %50 {offsets = [0, 0, 0], sizes = [9, 8, 4], strides = [1, 1, 1]} : vector<10x8x4xf32> to vector<9x8x4xf32>
    %52 = vector.extract_strided_slice %45 {offsets = [1, 0, 0, 0], sizes = [9, 1, 8, 4], strides = [1, 1, 1, 1]} : vector<10x2x8x4xf32> to vector<9x1x8x4xf32>
    %53 = vector.shape_cast %52 : vector<9x1x8x4xf32> to vector<9x8x4xf32>
    %54 = arith.maximumf %51, %53 : vector<9x8x4xf32>
    %c0_17 = arith.constant 0 : index
    %c0_18 = arith.constant 0 : index
    %c0_19 = arith.constant 0 : index
    %55 = vector.load %arg5[%c0_17, %c0_18, %c0_19] : memref<9x8x4xf32, #tpu.memory_space<vmem>>, vector<9x8x4xf32>
    tpu.vector_store %arg5[%c0_17, %c0_18, %c0_19], %54 {strides = array<i32>} : memref<9x8x4xf32, #tpu.memory_space<vmem>>, vector<9x8x4xf32>,
    return
  }
  func.func @transform_0(%arg0: i32) -> (i32, i32, i32) {
    %c0_i32 = arith.constant 0 : i32
    %c0_i32_0 = arith.constant 0 : i32
    %c0_i32_1 = arith.constant 0 : i32
    %c0_i32_2 = arith.constant 0 : i32
    return %c0_i32, %c0_i32_0, %c0_i32_1 : i32, i32, i32
  }
  func.func @transform_1(%arg0: i32) -> (i32, i32) {
    %c0_i32 = arith.constant 0 : i32
    %c0_i32_0 = arith.constant 0 : i32
    return %c0_i32, %arg0 : i32, i32
  }
  func.func @transform_2(%arg0: i32) -> (i32, i32) {
    %c0_i32 = arith.constant 0 : i32
    %c0_i32_0 = arith.constant 0 : i32
    return %c0_i32, %arg0 : i32, i32
  }
  func.func @transform_3(%arg0: i32) -> (i32, i32) {
    %c0_i32 = arith.constant 0 : i32
    %c0_i32_0 = arith.constant 0 : i32
    return %c0_i32, %arg0 : i32, i32
  }
  func.func @transform_4(%arg0: i32) -> (i32, i32, i32) {
    %c0_i32 = arith.constant 0 : i32
    %c0_i32_0 = arith.constant 0 : i32
    %c0_i32_1 = arith.constant 0 : i32
    return %c0_i32, %c0_i32_0, %arg0 : i32, i32, i32
  }
}

</mosaic_0001>

<llo_original>
// kernel: tpu_custom_call.1
$region0: #{tpu_custom_call.1}
  #allocation0 [shape = 'u32[]', space=smem, size = 0x4, offset = 0x4, fixed_abs, tag = 'smem constant byte address 0x4 - core index']
  #allocation1 [shape = 'u32[144,128]{1,0:T(1,128)}', space=vmem, size = 0x12000, scoped, tag = 'internal scratch']
  %s0 = inlined_call_operand.vmem [shape: f32[16,8,4], index: 0, kind: input, shape index: {}]
  %s1 = inlined_call_operand.vmem [shape: f32[12,4], index: 1, kind: input, shape index: {}]
  %s2 = inlined_call_operand.vmem [shape: f32[1,4], index: 2, kind: input, shape index: {}]
  %s3 = inlined_call_operand.vmem [shape: f32[1,4], index: 3, kind: input, shape index: {}]
  %s4 = inlined_call_operand.vmem [shape: f32[9,8,4], index: 4, kind: output, shape index: {}]
  %s5 = sld [smem:[#allocation0]]
  $region26: #{tpu_custom_call.1} parent=0
    _
  %s7 = ssub.s32 1, %s5
  %s8 = scalar_select 0, %s7, %s5
  // Predicated region
  $region2: #{tpu_custom_call.1} parent=0 // pred_check
    _
  $region3: #{tpu_custom_call.1} parent=0 // pred_check_branch
    %10 = sbr.rel (0) target = $region5
  $region4: #{tpu_custom_call.1} parent=0 // pred_region
    _
  $region5: #{tpu_custom_call.1} parent=0 // pred_fallthru
    _
  // Predicated region
  $region6: #{tpu_custom_call.1} parent=0 // pred_check
    _
  $region7: #{tpu_custom_call.1} parent=0 // pred_check_branch
    %12 = sbr.rel (0) target = $region9
  $region8: #{tpu_custom_call.1} parent=0 // pred_region
    _
  $region9: #{tpu_custom_call.1} parent=0 // pred_fallthru
    _
  // Predicated region
  $region10: #{tpu_custom_call.1} parent=0 // pred_check
    _
  $region11: #{tpu_custom_call.1} parent=0 // pred_check_branch
    %14 = sbr.rel (0) target = $region13
  $region12: #{tpu_custom_call.1} parent=0 // pred_region
    _
  $region13: #{tpu_custom_call.1} parent=0 // pred_fallthru
    _
  // Predicated region
  $region14: #{tpu_custom_call.1} parent=0 // pred_check
    _
  $region15: #{tpu_custom_call.1} parent=0 // pred_check_branch
    %16 = sbr.rel (0) target = $region17
  $region16: #{tpu_custom_call.1} parent=0 // pred_region
    _
  $region17: #{tpu_custom_call.1} parent=0 // pred_fallthru
    _
  %v17 = vld [vmem:[%s0] sm:$0xff]
  %v18 = vld [vmem:[%s0 + $0x8] sm:$0xff]
  %v19 = vld [vmem:[%s0 + $0x10] sm:$0xff]
  %v20 = vld [vmem:[%s0 + $0x18] sm:$0xff]
  %v21 = vld [vmem:[%s0 + $0x20] sm:$0xff]
  %v22 = vld [vmem:[%s0 + $0x28] sm:$0xff]
  %v23 = vld [vmem:[%s0 + $0x30] sm:$0xff]
  %v24 = vld [vmem:[%s0 + $0x38] sm:$0xff]
  %v25 = vld [vmem:[%s0 + $0x40] sm:$0xff]
  %v26 = vld [vmem:[%s0 + $0x48] sm:$0xff]
  %v27 = vld [vmem:[%s0 + $0x50] sm:$0xff]
  %v28 = vld [vmem:[%s0 + $0x58] sm:$0xff]
  %v29 = vld [vmem:[%s0 + $0x60] sm:$0xff]
  %v30 = vld [vmem:[%s0 + $0x68] sm:$0xff]
  %v31 = vld [vmem:[%s0 + $0x70] sm:$0xff]
  %v32 = vld [vmem:[%s0 + $0x78] sm:$0xff]
  %49 = vrot.lane.b32.xlu0 %v32, 4
  %v50 = vpop.permute.xlu0 %49
  %51 = vrot.lane.b32.xlu0 %v17, 4
  %v52 = vpop.permute.xlu0 %51
  %53 = vrot.lane.b32.xlu0 %v18, 4
  %v54 = vpop.permute.xlu0 %53
  %55 = vrot.lane.b32.xlu0 %v19, 4
  %v56 = vpop.permute.xlu0 %55
  %57 = vrot.lane.b32.xlu0 %v20, 4
  %v58 = vpop.permute.xlu0 %57
  %59 = vrot.lane.b32.xlu0 %v21, 4
  %v60 = vpop.permute.xlu0 %59
  %61 = vrot.lane.b32.xlu0 %v22, 4
  %v62 = vpop.permute.xlu0 %61
  %63 = vrot.lane.b32.xlu0 %v23, 4
  %v64 = vpop.permute.xlu0 %63
  %65 = vrot.lane.b32.xlu0 %v24, 4
  %v66 = vpop.permute.xlu0 %65
  %67 = vrot.lane.b32.xlu0 %v25, 4
  %v68 = vpop.permute.xlu0 %67
  %69 = vrot.lane.b32.xlu0 %v26, 4
  %v70 = vpop.permute.xlu0 %69
  %71 = vrot.lane.b32.xlu0 %v27, 4
  %v72 = vpop.permute.xlu0 %71
  %73 = vrot.lane.b32.xlu0 %v28, 4
  %v74 = vpop.permute.xlu0 %73
  %75 = vrot.lane.b32.xlu0 %v29, 4
  %v76 = vpop.permute.xlu0 %75
  %77 = vrot.lane.b32.xlu0 %v30, 4
  %v78 = vpop.permute.xlu0 %77
  %79 = vrot.lane.b32.xlu0 %v31, 4
  %v80 = vpop.permute.xlu0 %79
  %97 = vrot.lane.b32.xlu0 %v17, 8
  %v98 = vpop.permute.xlu0 %97
  %99 = vrot.lane.b32.xlu0 %v18, 8
  %v100 = vpop.permute.xlu0 %99
  %101 = vrot.lane.b32.xlu0 %v19, 8
  %v102 = vpop.permute.xlu0 %101
  %103 = vrot.lane.b32.xlu0 %v20, 8
  %v104 = vpop.permute.xlu0 %103
  %105 = vrot.lane.b32.xlu0 %v21, 8
  %v106 = vpop.permute.xlu0 %105
  %107 = vrot.lane.b32.xlu0 %v22, 8
  %v108 = vpop.permute.xlu0 %107
  %109 = vrot.lane.b32.xlu0 %v23, 8
  %v110 = vpop.permute.xlu0 %109
  %111 = vrot.lane.b32.xlu0 %v24, 8
  %v112 = vpop.permute.xlu0 %111
  %113 = vrot.lane.b32.xlu0 %v25, 8
  %v114 = vpop.permute.xlu0 %113
  %115 = vrot.lane.b32.xlu0 %v26, 8
  %v116 = vpop.permute.xlu0 %115
  %117 = vrot.lane.b32.xlu0 %v27, 8
  %v118 = vpop.permute.xlu0 %117
  %119 = vrot.lane.b32.xlu0 %v28, 8
  %v120 = vpop.permute.xlu0 %119
  %121 = vrot.lane.b32.xlu0 %v29, 8
  %v122 = vpop.permute.xlu0 %121
  %123 = vrot.lane.b32.xlu0 %v30, 8
  %v124 = vpop.permute.xlu0 %123
  %125 = vrot.lane.b32.xlu0 %v31, 8
  %v126 = vpop.permute.xlu0 %125
  %127 = vrot.lane.b32.xlu0 %v32, 8
  %v128 = vpop.permute.xlu0 %127
  %vm145 = vcmask 31744
  %v146 = vsel %vm145, %v31, %v50
  %v147 = vsel %vm145, %v32, %v52
  %v148 = vsel %vm145, %v17, %v54
  %v149 = vsel %vm145, %v18, %v56
  %v150 = vsel %vm145, %v19, %v58
  %v151 = vsel %vm145, %v20, %v60
  %v152 = vsel %vm145, %v21, %v62
  %v153 = vsel %vm145, %v22, %v64
  %v154 = vsel %vm145, %v23, %v66
  %v155 = vsel %vm145, %v24, %v68
  %v156 = vsel %vm145, %v25, %v70
  %v157 = vsel %vm145, %v26, %v72
  %v158 = vsel %vm145, %v27, %v74
  %v159 = vsel %vm145, %v28, %v76
  %v160 = vsel %vm145, %v29, %v78
  %v161 = vsel %vm145, %v30, %v80
  %vm162 = vcmask 64512
  %v163 = vsel %vm162, %v146, %v98
  %v164 = vsel %vm162, %v147, %v100
  %v165 = vsel %vm162, %v148, %v102
  %v166 = vsel %vm162, %v149, %v104
  %v167 = vsel %vm162, %v150, %v106
  %v168 = vsel %vm162, %v151, %v108
  %v169 = vsel %vm162, %v152, %v110
  %v170 = vsel %vm162, %v153, %v112
  %v171 = vsel %vm162, %v154, %v114
  %v172 = vsel %vm162, %v155, %v116
  %v173 = vsel %vm162, %v156, %v118
  %v174 = vsel %vm162, %v157, %v120
  %v175 = vsel %vm162, %v158, %v122
  %v176 = vsel %vm162, %v159, %v124
  %v177 = vsel %vm162, %v160, %v126
  %v178 = vsel %vm162, %v161, %v128
  %v179 = vld [vmem:[%s1] sm:$0xff]
  %v180 = vld [vmem:[%s1 + $0x8] sm:$0xf]
  %vm181 = vcmask 97280
  %v183 = vsel %vm181, %v163, 0
  %v186 = vsel %vm181, %v164, 0
  %v189 = vsel %vm181, %v165, 0
  %v192 = vsel %vm181, %v166, 0
  %v195 = vsel %vm181, %v167, 0
  %v198 = vsel %vm181, %v168, 0
  %v201 = vsel %vm181, %v169, 0
  %v204 = vsel %vm181, %v170, 0
  %v207 = vsel %vm181, %v171, 0
  %v210 = vsel %vm181, %v172, 0
  %v213 = vsel %vm181, %v173, 0
  %v216 = vsel %vm181, %v174, 0
  %v219 = vsel %vm181, %v175, 0
  %v222 = vsel %vm181, %v176, 0
  %v225 = vsel %vm181, %v177, 0
  %v228 = vsel %vm181, %v178, 0
  %vm230 = vcmask 1043456
  %v232 = vsel %vm230, %v180, 0
  %234 = vmatprep.subr.mxu0 0.0
  %235 = vmatpush1.msra.mxu0 0.0
  %236 = vmatprep.subr.mxu0 0.0
  %237 = vmatpush1.msra.mxu0 0.0
  %238 = vmatprep.subr.mxu0 0.0
  %239 = vmatpush1.msra.mxu0 0.0
  %240 = vmatprep.subr.mxu0 0.0
  %241 = vmatpush1.msra.mxu0 0.0
  %242 = vmatprep.subr.mxu0 0.0
  %243 = vmatpush1.msra.mxu0 0.0
  %244 = vmatprep.subr.mxu0 0.0
  %245 = vmatpush1.msra.mxu0 0.0
  %246 = vmatprep.subr.mxu0 0.0
  %247 = vmatpush1.msra.mxu0 0.0
  %248 = vmatprep.subr.mxu0 0.0
  %249 = vmatpush1.msra.mxu0 0.0
  %250 = vmatprep.subr.mxu0 0.0
  %251 = vmatpush1.msra.mxu0 0.0
  %252 = vmatprep.subr.mxu0 0.0
  %253 = vmatpush1.msra.mxu0 0.0
  %254 = vmatprep.subr.mxu0 0.0
  %255 = vmatpush1.msra.mxu0 0.0
  %256 = vmatprep.subr.mxu0 0.0
  %257 = vmatpush1.msra.mxu0 0.0
  %258 = vmatprep.subr.mxu0 0.0
  %259 = vmatpush1.msra.mxu0 0.0
  %260 = vmatprep.subr.mxu0 0.0
  %261 = vmatpush1.msra.mxu0 0.0
  %262 = vmatprep.subr.mxu0 0.0
  %263 = vmatpush1.msra.mxu0 %v232
  %264 = vmatprep.subr.mxu0 0.0
  %265 = vmatpush1.msra.mxu0 %v179
  %266 = vmatprep.subr.mxu0 0.0
  %267 = vmatpush2.msra.mxu0 0.0
  %268 = vmatprep.subr.mxu0 0.0
  %269 = vmatpush2.msra.mxu0 0.0
  %270 = vmatprep.subr.mxu0 0.0
  %271 = vmatpush2.msra.mxu0 0.0
  %272 = vmatprep.subr.mxu0 0.0
  %273 = vmatpush2.msra.mxu0 0.0
  %274 = vmatprep.subr.mxu0 0.0
  %275 = vmatpush2.msra.mxu0 0.0
  %276 = vmatprep.subr.mxu0 0.0
  %277 = vmatpush2.msra.mxu0 0.0
  %278 = vmatprep.subr.mxu0 0.0
  %279 = vmatpush2.msra.mxu0 0.0
  %280 = vmatprep.subr.mxu0 0.0
  %281 = vmatpush2.msra.mxu0 0.0
  %282 = vmatprep.subr.mxu0 0.0
  %283 = vmatpush2.msra.mxu0 0.0
  %284 = vmatprep.subr.mxu0 0.0
  %285 = vmatpush2.msra.mxu0 0.0
  %286 = vmatprep.subr.mxu0 0.0
  %287 = vmatpush2.msra.mxu0 0.0
  %288 = vmatprep.subr.mxu0 0.0
  %289 = vmatpush2.msra.mxu0 0.0
  %290 = vmatprep.subr.mxu0 0.0
  %291 = vmatpush2.msra.mxu0 0.0
  %292 = vmatprep.subr.mxu0 0.0
  %293 = vmatpush2.msra.mxu0 0.0
  %294 = vmatprep.subr.mxu0 0.0
  %295 = vmatpush2.msra.mxu0 0.0
  %296 = vmatprep.subr.mxu0 0.0
  %297 = vmatpush2.msra.mxu0 0.0
  %298 = vmatprep.mubr.f32.mxu0 0.0
  %299 = vmatmul.mubr.f32.gmra.mxu0 %v183
  %v300 = vpop.f32.mrf.mxu0
  %v301 = vadd.f32 0.0, %v300
  %v302 = vpop.f32.mrf.mxu0
  %303 = vmatprep.mubr.f32.mxu0 0.0
  %304 = vmatmul.mubr.f32.gmra.mxu0 %v186
  %v305 = vpop.f32.mrf.mxu0
  %v306 = vadd.f32 0.0, %v305
  %v307 = vpop.f32.mrf.mxu0
  %308 = vmatprep.mubr.f32.mxu0 0.0
  %309 = vmatmul.mubr.f32.gmra.mxu0 %v189
  %v310 = vpop.f32.mrf.mxu0
  %v311 = vadd.f32 0.0, %v310
  %v312 = vpop.f32.mrf.mxu0
  %313 = vmatprep.mubr.f32.mxu0 0.0
  %314 = vmatmul.mubr.f32.gmra.mxu0 %v192
  %v315 = vpop.f32.mrf.mxu0
  %v316 = vadd.f32 0.0, %v315
  %v317 = vpop.f32.mrf.mxu0
  %318 = vmatprep.mubr.f32.mxu0 0.0
  %319 = vmatmul.mubr.f32.gmra.mxu0 %v195
  %v320 = vpop.f32.mrf.mxu0
  %v321 = vadd.f32 0.0, %v320
  %v322 = vpop.f32.mrf.mxu0
  %323 = vmatprep.mubr.f32.mxu0 0.0
  %324 = vmatmul.mubr.f32.gmra.mxu0 %v198
  %v325 = vpop.f32.mrf.mxu0
  %v326 = vadd.f32 0.0, %v325
  %v327 = vpop.f32.mrf.mxu0
  %328 = vmatprep.mubr.f32.mxu0 0.0
  %329 = vmatmul.mubr.f32.gmra.mxu0 %v201
  %v330 = vpop.f32.mrf.mxu0
  %v331 = vadd.f32 0.0, %v330
  %v332 = vpop.f32.mrf.mxu0
  %333 = vmatprep.mubr.f32.mxu0 0.0
  %334 = vmatmul.mubr.f32.gmra.mxu0 %v204
  %v335 = vpop.f32.mrf.mxu0
  %v336 = vadd.f32 0.0, %v335
  %v337 = vpop.f32.mrf.mxu0
  %338 = vmatprep.mubr.f32.mxu0 0.0
  %339 = vmatmul.mubr.f32.gmra.mxu0 %v207
  %v340 = vpop.f32.mrf.mxu0
  %v341 = vadd.f32 0.0, %v340
  %v342 = vpop.f32.mrf.mxu0
  %343 = vmatprep.mubr.f32.mxu0 0.0
  %344 = vmatmul.mubr.f32.gmra.mxu0 %v210
  %v345 = vpop.f32.mrf.mxu0
  %v346 = vadd.f32 0.0, %v345
  %v347 = vpop.f32.mrf.mxu0
  %348 = vmatprep.mubr.f32.mxu0 0.0
  %349 = vmatmul.mubr.f32.gmra.mxu0 %v213
  %v350 = vpop.f32.mrf.mxu0
  %v351 = vadd.f32 0.0, %v350
  %v352 = vpop.f32.mrf.mxu0
  %353 = vmatprep.mubr.f32.mxu0 0.0
  %354 = vmatmul.mubr.f32.gmra.mxu0 %v216
  %v355 = vpop.f32.mrf.mxu0
  %v356 = vadd.f32 0.0, %v355
  %v357 = vpop.f32.mrf.mxu0
  %358 = vmatprep.mubr.f32.mxu0 0.0
  %359 = vmatmul.mubr.f32.gmra.mxu0 %v219
  %v360 = vpop.f32.mrf.mxu0
  %v361 = vadd.f32 0.0, %v360
  %v362 = vpop.f32.mrf.mxu0
  %363 = vmatprep.mubr.f32.mxu0 0.0
  %364 = vmatmul.mubr.f32.gmra.mxu0 %v222
  %v365 = vpop.f32.mrf.mxu0
  %v366 = vadd.f32 0.0, %v365
  %v367 = vpop.f32.mrf.mxu0
  %368 = vmatprep.mubr.f32.mxu0 0.0
  %369 = vmatmul.mubr.f32.gmra.mxu0 %v225
  %v370 = vpop.f32.mrf.mxu0
  %v371 = vadd.f32 0.0, %v370
  %v372 = vpop.f32.mrf.mxu0
  %373 = vmatprep.mubr.f32.mxu0 0.0
  %374 = vmatmul.mubr.f32.gmra.mxu0 %v228
  %v375 = vpop.f32.mrf.mxu0
  %v376 = vadd.f32 0.0, %v375
  %v377 = vpop.f32.mrf.mxu0
  %378 = vmatprep.mubr.f32.mxu0 0.0
  %379 = vmatmul.mubr.f32.gmra.mxu0 %v183
  %v380 = vpop.f32.mrf.mxu0
  %v381 = vadd.f32 0.0, %v380
  %v382 = vpop.f32.mrf.mxu0
  %383 = vmatprep.mubr.f32.mxu0 0.0
  %384 = vmatmul.mubr.f32.gmra.mxu0 %v186
  %v385 = vpop.f32.mrf.mxu0
  %v386 = vadd.f32 0.0, %v385
  %v387 = vpop.f32.mrf.mxu0
  %388 = vdwg.mxu0
  %v389 = vsel %vm145, %v301, 0.0
  %v390 = vsel %vm145, %v306, 0.0
  %v391 = vadd.f32 %v389, %v390
  %v392 = vsel %vm145, %v311, 0.0
  %v393 = vadd.f32 %v391, %v392
  %v394 = vsel %vm145, %v316, 0.0
  %v395 = vadd.f32 %v393, %v394
  %v396 = vsel %vm145, %v321, 0.0
  %v397 = vadd.f32 %v395, %v396
  %v398 = vsel %vm145, %v326, 0.0
  %v399 = vadd.f32 %v397, %v398
  %v400 = vsel %vm145, %v331, 0.0
  %v401 = vadd.f32 %v399, %v400
  %v402 = vsel %vm145, %v336, 0.0
  %v403 = vadd.f32 %v401, %v402
  %v404 = vsel %vm145, %v341, 0.0
  %v405 = vadd.f32 %v403, %v404
  %v406 = vsel %vm145, %v346, 0.0
  %v407 = vadd.f32 %v405, %v406
  %v408 = vsel %vm145, %v351, 0.0
  %v409 = vadd.f32 %v407, %v408
  %v410 = vsel %vm145, %v356, 0.0
  %v411 = vadd.f32 %v409, %v410
  %v412 = vsel %vm145, %v361, 0.0
  %v413 = vadd.f32 %v411, %v412
  %v414 = vsel %vm145, %v366, 0.0
  %v415 = vadd.f32 %v413, %v414
  %v416 = vsel %vm145, %v371, 0.0
  %v417 = vadd.f32 %v415, %v416
  %v418 = vsel %vm145, %v376, 0.0
  %v419 = vadd.f32 %v417, %v418
  %v420 = vsel %vm145, %v381, 0.0
  %v421 = vadd.f32 %v419, %v420
  %v422 = vsel %vm145, %v386, 0.0
  %v423 = vadd.f32 %v421, %v422
  %v424 = vrot.slane %v423, 4
  %v425 = vadd.f32 %v423, %v424
  %v426 = vrot.slane %v425, 2
  %v427 = vadd.f32 %v425, %v426
  %v428 = vrot.slane %v427, 1
  %v429 = vadd.f32 %v427, %v428
  %v430 = vmul.f32 %v301, %v301
  %v431 = vmul.f32 %v306, %v306
  %v432 = vmul.f32 %v311, %v311
  %v433 = vmul.f32 %v316, %v316
  %v434 = vmul.f32 %v321, %v321
  %v435 = vmul.f32 %v326, %v326
  %v436 = vmul.f32 %v331, %v331
  %v437 = vmul.f32 %v336, %v336
  %v438 = vmul.f32 %v341, %v341
  %v439 = vmul.f32 %v346, %v346
  %v440 = vmul.f32 %v351, %v351
  %v441 = vmul.f32 %v356, %v356
  %v442 = vmul.f32 %v361, %v361
  %v443 = vmul.f32 %v366, %v366
  %v444 = vmul.f32 %v371, %v371
  %v445 = vmul.f32 %v376, %v376
  %v446 = vmul.f32 %v381, %v381
  %v447 = vmul.f32 %v386, %v386
  %v448 = vsel %vm145, %v430, 0.0
  %v449 = vsel %vm145, %v431, 0.0
  %v450 = vadd.f32 %v448, %v449
  %v451 = vsel %vm145, %v432, 0.0
  %v452 = vadd.f32 %v450, %v451
  %v453 = vsel %vm145, %v433, 0.0
  %v454 = vadd.f32 %v452, %v453
  %v455 = vsel %vm145, %v434, 0.0
  %v456 = vadd.f32 %v454, %v455
  %v457 = vsel %vm145, %v435, 0.0
  %v458 = vadd.f32 %v456, %v457
  %v459 = vsel %vm145, %v436, 0.0
  %v460 = vadd.f32 %v458, %v459
  %v461 = vsel %vm145, %v437, 0.0
  %v462 = vadd.f32 %v460, %v461
  %v463 = vsel %vm145, %v438, 0.0
  %v464 = vadd.f32 %v462, %v463
  %v465 = vsel %vm145, %v439, 0.0
  %v466 = vadd.f32 %v464, %v465
  %v467 = vsel %vm145, %v440, 0.0
  %v468 = vadd.f32 %v466, %v467
  %v469 = vsel %vm145, %v441, 0.0
  %v470 = vadd.f32 %v468, %v469
  %v471 = vsel %vm145, %v442, 0.0
  %v472 = vadd.f32 %v470, %v471
  %v473 = vsel %vm145, %v443, 0.0
  %v474 = vadd.f32 %v472, %v473
  %v475 = vsel %vm145, %v444, 0.0
  %v476 = vadd.f32 %v474, %v475
  %v477 = vsel %vm145, %v445, 0.0
  %v478 = vadd.f32 %v476, %v477
  %v479 = vsel %vm145, %v446, 0.0
  %v480 = vadd.f32 %v478, %v479
  %v481 = vsel %vm145, %v447, 0.0
  %v482 = vadd.f32 %v480, %v481
  %v483 = vrot.slane %v482, 4
  %v484 = vadd.f32 %v482, %v483
  %v485 = vrot.slane %v484, 2
  %v486 = vadd.f32 %v484, %v485
  %v487 = vrot.slane %v486, 1
  %v488 = vadd.f32 %v486, %v487
  %v489 = vmul.f32 %v429, 0.027777778
  %v490 = vmul.f32 %v488, 0.027777778
  %v491 = vmul.f32 %v489, %v489
  %v492 = vsub.f32 %v490, %v491
  %v493 = vld [vmem:[%s2] sm:$0x1]
  %v494 = vadd.f32 %v492, 1e-05
  %v495 = vrsqrt.pop %v494
  %v496 = vmul.f32 %v493, %v495
  %v497 = vld [vmem:[%s3] sm:$0x1]
  %v498 = vmul.f32 %v489, %v496
  %v499 = vsub.f32 %v497, %v498
  %v501 = vlaneseq
  %v502 = vshrl.u32 %v501, 7
  %v503 = vsub.s32 0, %v502
  %v504 = vrot.slane %v496, %v503
  %v506 = vmul.f32 %v301, %v504
  %v507 = vmul.f32 %v306, %v504
  %v508 = vmul.f32 %v311, %v504
  %v509 = vmul.f32 %v316, %v504
  %v510 = vmul.f32 %v321, %v504
  %v511 = vmul.f32 %v326, %v504
  %v512 = vmul.f32 %v331, %v504
  %v513 = vmul.f32 %v336, %v504
  %v514 = vmul.f32 %v341, %v504
  %v515 = vmul.f32 %v346, %v504
  %v516 = vmul.f32 %v351, %v504
  %v517 = vmul.f32 %v356, %v504
  %v518 = vmul.f32 %v361, %v504
  %v519 = vmul.f32 %v366, %v504
  %v520 = vmul.f32 %v371, %v504
  %v521 = vmul.f32 %v376, %v504
  %v522 = vmul.f32 %v381, %v504
  %v523 = vmul.f32 %v386, %v504
  %v525 = vlaneseq
  %v526 = vshrl.u32 %v525, 7
  %v527 = vsub.s32 0, %v526
  %v528 = vrot.slane %v499, %v527
  %v530 = vadd.f32 %v506, %v528
  %v531 = vadd.f32 %v507, %v528
  %v532 = vadd.f32 %v508, %v528
  %v533 = vadd.f32 %v509, %v528
  %v534 = vadd.f32 %v510, %v528
  %v535 = vadd.f32 %v511, %v528
  %v536 = vadd.f32 %v512, %v528
  %v537 = vadd.f32 %v513, %v528
  %v538 = vadd.f32 %v514, %v528
  %v539 = vadd.f32 %v515, %v528
  %v540 = vadd.f32 %v516, %v528
  %v541 = vadd.f32 %v517, %v528
  %v542 = vadd.f32 %v518, %v528
  %v543 = vadd.f32 %v519, %v528
  %v544 = vadd.f32 %v520, %v528
  %v545 = vadd.f32 %v521, %v528
  %v546 = vadd.f32 %v522, %v528
  %v547 = vadd.f32 %v523, %v528
  %vm548 = vcmp.gt.f32.partialorder %v530, 0.0
  %vm549 = vcmp.gt.f32.partialorder %v531, 0.0
  %vm550 = vcmp.gt.f32.partialorder %v532, 0.0
  %vm551 = vcmp.gt.f32.partialorder %v533, 0.0
  %vm552 = vcmp.gt.f32.partialorder %v534, 0.0
  %vm553 = vcmp.gt.f32.partialorder %v535, 0.0
  %vm554 = vcmp.gt.f32.partialorder %v536, 0.0
  %vm555 = vcmp.gt.f32.partialorder %v537, 0.0
  %vm556 = vcmp.gt.f32.partialorder %v538, 0.0
  %vm557 = vcmp.gt.f32.partialorder %v539, 0.0
  %vm558 = vcmp.gt.f32.partialorder %v540, 0.0
  %vm559 = vcmp.gt.f32.partialorder %v541, 0.0
  %vm560 = vcmp.gt.f32.partialorder %v542, 0.0
  %vm561 = vcmp.gt.f32.partialorder %v543, 0.0
  %vm562 = vcmp.gt.f32.partialorder %v544, 0.0
  %vm563 = vcmp.gt.f32.partialorder %v545, 0.0
  %vm564 = vcmp.gt.f32.partialorder %v546, 0.0
  %vm565 = vcmp.gt.f32.partialorder %v547, 0.0
  %v566 = vmin.f32 %v530, 0.0
  %v567 = vmin.f32 %v531, 0.0
  %v568 = vmin.f32 %v532, 0.0
  %v569 = vmin.f32 %v533, 0.0
  %v570 = vmin.f32 %v534, 0.0
  %v571 = vmin.f32 %v535, 0.0
  %v572 = vmin.f32 %v536, 0.0
  %v573 = vmin.f32 %v537, 0.0
  %v574 = vmin.f32 %v538, 0.0
  %v575 = vmin.f32 %v539, 0.0
  %v576 = vmin.f32 %v540, 0.0
  %v577 = vmin.f32 %v541, 0.0
  %v578 = vmin.f32 %v542, 0.0
  %v579 = vmin.f32 %v543, 0.0
  %v580 = vmin.f32 %v544, 0.0
  %v581 = vmin.f32 %v545, 0.0
  %v582 = vmin.f32 %v546, 0.0
  %v583 = vmin.f32 %v547, 0.0
  %v584 = vmul.f32 %v566, 1.442695
  %v585 = vpow.pop %v584
  %v586 = vmul.f32 %v567, 1.442695
  %v587 = vpow.pop %v586
  %v588 = vmul.f32 %v568, 1.442695
  %v589 = vpow.pop %v588
  %v590 = vmul.f32 %v569, 1.442695
  %v591 = vpow.pop %v590
  %v592 = vmul.f32 %v570, 1.442695
  %v593 = vpow.pop %v592
  %v594 = vmul.f32 %v571, 1.442695
  %v595 = vpow.pop %v594
  %v596 = vmul.f32 %v572, 1.442695
  %v597 = vpow.pop %v596
  %v598 = vmul.f32 %v573, 1.442695
  %v599 = vpow.pop %v598
  %v600 = vmul.f32 %v574, 1.442695
  %v601 = vpow.pop %v600
  %v602 = vmul.f32 %v575, 1.442695
  %v603 = vpow.pop %v602
  %v604 = vmul.f32 %v576, 1.442695
  %v605 = vpow.pop %v604
  %v606 = vmul.f32 %v577, 1.442695
  %v607 = vpow.pop %v606
  %v608 = vmul.f32 %v578, 1.442695
  %v609 = vpow.pop %v608
  %v610 = vmul.f32 %v579, 1.442695
  %v611 = vpow.pop %v610
  %v612 = vmul.f32 %v580, 1.442695
  %v613 = vpow.pop %v612
  %v614 = vmul.f32 %v581, 1.442695
  %v615 = vpow.pop %v614
  %v616 = vmul.f32 %v582, 1.442695
  %v617 = vpow.pop %v616
  %v618 = vmul.f32 %v583, 1.442695
  %v619 = vpow.pop %v618
  %v620 = vsub.f32 %v585, 1.0
  %v621 = vsub.f32 %v587, 1.0
  %v622 = vsub.f32 %v589, 1.0
  %v623 = vsub.f32 %v591, 1.0
  %v624 = vsub.f32 %v593, 1.0
  %v625 = vsub.f32 %v595, 1.0
  %v626 = vsub.f32 %v597, 1.0
  %v627 = vsub.f32 %v599, 1.0
  %v628 = vsub.f32 %v601, 1.0
  %v629 = vsub.f32 %v603, 1.0
  %v630 = vsub.f32 %v605, 1.0
  %v631 = vsub.f32 %v607, 1.0
  %v632 = vsub.f32 %v609, 1.0
  %v633 = vsub.f32 %v611, 1.0
  %v634 = vsub.f32 %v613, 1.0
  %v635 = vsub.f32 %v615, 1.0
  %v636 = vsub.f32 %v617, 1.0
  %v637 = vsub.f32 %v619, 1.0
  %v638 = vsel %vm548, %v530, %v620
  %v639 = vsel %vm549, %v531, %v621
  %v640 = vsel %vm550, %v532, %v622
  %v641 = vsel %vm551, %v533, %v623
  %v642 = vsel %vm552, %v534, %v624
  %v643 = vsel %vm553, %v535, %v625
  %v644 = vsel %vm554, %v536, %v626
  %v645 = vsel %vm555, %v537, %v627
  %v646 = vsel %vm556, %v538, %v628
  %v647 = vsel %vm557, %v539, %v629
  %v648 = vsel %vm558, %v540, %v630
  %v649 = vsel %vm559, %v541, %v631
  %v650 = vsel %vm560, %v542, %v632
  %v651 = vsel %vm561, %v543, %v633
  %v652 = vsel %vm562, %v544, %v634
  %v653 = vsel %vm563, %v545, %v635
  %v654 = vsel %vm564, %v546, %v636
  %v655 = vsel %vm565, %v547, %v637
  %v656 = vmax.f32 %v639, %v640
  %v657 = vmax.f32 %v641, %v642
  %v658 = vmax.f32 %v643, %v644
  %v659 = vmax.f32 %v645, %v646
  %v660 = vmax.f32 %v647, %v648
  %v661 = vmax.f32 %v649, %v650
  %v662 = vmax.f32 %v651, %v652
  %v663 = vmax.f32 %v653, %v654
  %v664 = vmax.f32 %v638, %v639
  %v665 = vmax.f32 %v656, %v641
  %v666 = vmax.f32 %v657, %v643
  %v667 = vmax.f32 %v658, %v645
  %v668 = vmax.f32 %v659, %v647
  %v669 = vmax.f32 %v660, %v649
  %v670 = vmax.f32 %v661, %v651
  %v671 = vmax.f32 %v662, %v653
  %v672 = vmax.f32 %v663, %v655
  %673 = vst.msk [vmem:[%s4] sm:$0xff] %vm145, %v664
  %674 = vst.msk [vmem:[%s4 + $0x8] sm:$0xff] %vm145, %v665
  %675 = vst.msk [vmem:[%s4 + $0x10] sm:$0xff] %vm145, %v666
  %676 = vst.msk [vmem:[%s4 + $0x18] sm:$0xff] %vm145, %v667
  %677 = vst.msk [vmem:[%s4 + $0x20] sm:$0xff] %vm145, %v668
  %678 = vst.msk [vmem:[%s4 + $0x28] sm:$0xff] %vm145, %v669
  %679 = vst.msk [vmem:[%s4 + $0x30] sm:$0xff] %vm145, %v670
  %680 = vst.msk [vmem:[%s4 + $0x38] sm:$0xff] %vm145, %v671
  %681 = vst.msk [vmem:[%s4 + $0x40] sm:$0xff] %vm145, %v672
  // Predicated region
  $region18: #{tpu_custom_call.1} parent=0 // pred_check
    _
  $region19: #{tpu_custom_call.1} parent=0 // pred_check_branch
    %683 = sbr.rel (0) target = $region21
  $region20: #{tpu_custom_call.1} parent=0 // pred_region
    _
  $region21: #{tpu_custom_call.1} parent=0 // pred_fallthru
    _
  // Predicated region
  $region22: #{tpu_custom_call.1} parent=0 // pred_check
    _
  $region23: #{tpu_custom_call.1} parent=0 // pred_check_branch
    %685 = sbr.rel (0) target = $region25
  $region24: #{tpu_custom_call.1} parent=0 // pred_region
    _
  $region25: #{tpu_custom_call.1} parent=0 // pred_fallthru
    _

</llo_original>
